<compile_context>
chip_gen: v7x
topology: tpu7x:2x2x1
jax: 0.10.0
libtpu: 0.0.40
codegen_flags: <defaults>
</compile_context>

<pallas_src>
import numpy as np
import jax
import jax.numpy as jnp
from jax.experimental import pallas as pl
from jax.experimental.pallas import tpu as pltpu

_LANES = 128
_MAX_TILE_ROWS = 2048          # 2048 x 128 f32 = 1 MiB per input block
                               # (x2 inputs x2 pipeline buffers = 4 MiB VMEM,
                               #  safe on v5e/v6e/v7x scoped-VMEM defaults)


def _round_up(x, m):
    return ((x + m - 1) // m) * m


# ---------------------------------------------------------------------------
# Kernel: grid = (B, num_chunks).  For image b, accumulate per-lane partial
# sums of (bg - pred)^2 across the chunk axis in a (1, 128) VMEM scratch;
# on the last chunk, do the final lane reduction and broadcast the scalar
# into that image's output tile.
#   - batch axis is "parallel"   -> shards across TensorCores (v7x megacore)
#   - chunk axis is "arbitrary"  -> carried reduction
# ---------------------------------------------------------------------------
def _sse_kernel(bg_ref, pr_ref, out_ref, acc_ref):
    k = pl.program_id(1)

    @pl.when(k == 0)
    def _init():
        acc_ref[...] = jnp.zeros_like(acc_ref)

    # Native-dtype blocks are cast here (free VPU work) instead of in HBM.
    diff = bg_ref[...].astype(jnp.float32) - pr_ref[...].astype(jnp.float32)
    # Sublane reduction per chunk -> (1, 128); lane reduction deferred.
    acc_ref[...] += jnp.sum(diff * diff, axis=1)

    @pl.when(k == pl.num_programs(1) - 1)
    def _finalize():
        total = jnp.sum(acc_ref[...])
        out_ref[...] = jnp.full(out_ref.shape, total, dtype=out_ref.dtype)


def eval_metrics(backgrounds, preds, data_range=1.0):
    """Returns (psnr_sum, mse_sum) summed over the batch, as in _eval_step."""
    assert backgrounds.shape == preds.shape
    B = backgrounds.shape[0]
    n_elems = int(np.prod(backgrounds.shape[1:]))

    # Lane-dense flattening: (B, C, H, W) -> (B, N) -> (B, rows_pad, 128).
    bg = backgrounds.reshape(B, -1)
    pr = preds.reshape(B, -1)
    rows = _round_up(pl.cdiv(n_elems, _LANES), 8)
    tile_rows = min(rows, _MAX_TILE_ROWS)
    rows_pad = _round_up(rows, tile_rows)
    n_pad = rows_pad * _LANES
    if n_pad != n_elems:
        # Pad BOTH inputs identically with zeros -> diff == 0 in the pad
        # region, so the SSE is unaffected.
        bg = jnp.pad(bg, ((0, 0), (0, n_pad - n_elems)))
        pr = jnp.pad(pr, ((0, 0), (0, n_pad - n_elems)))
    bg = bg.reshape(B, rows_pad, _LANES)
    pr = pr.reshape(B, rows_pad, _LANES)

    num_chunks = rows_pad // tile_rows

    sse_tiles = pl.pallas_call(
        _sse_kernel,
        out_shape=jax.ShapeDtypeStruct((B, 8, _LANES), jnp.float32),
        grid_spec=pltpu.PrefetchScalarGridSpec(
            num_scalar_prefetch=0,
            grid=(B, num_chunks),
            in_specs=[
                pl.BlockSpec((1, tile_rows, _LANES), lambda b, k: (b, k, 0)),
                pl.BlockSpec((1, tile_rows, _LANES), lambda b, k: (b, k, 0)),
            ],
            out_specs=pl.BlockSpec((1, 8, _LANES), lambda b, k: (b, 0, 0)),
            scratch_shapes=[pltpu.VMEM((1, _LANES), jnp.float32)],
        ),
        compiler_params=pltpu.CompilerParams(
            dimension_semantics=("parallel", "arbitrary"),
            vmem_limit_bytes=32 * 1024 * 1024),
    )(bg, pr)

    sse = sse_tiles[:, 0, 0]                       # (B,) per-image SSE
    mse = sse / float(n_elems)
    # NOTE: mse == 0 gives psnr == inf, matching the numpy/skimage reference.
    psnr = 10.0 * jnp.log10((data_range * data_range) / mse)
    return jnp.sum(psnr), jnp.sum(mse)


class BaseSystemJAX:
    """JAX/Pallas mirror of BaseSystem's evaluation path."""

    def forward_test(self, images):
        # Base class defines no model; identity pass-through.
        return images

    def forward(self, batch, batch_idx=0, mode="test"):
        if mode == "val":
            return self._eval_step(batch, validation=True)
        elif mode == "test":
            return self.forward_test(batch)
        else:
            raise NotImplementedError(
                f"mode={mode} (train step not defined in base class)")

    def _eval_step(self, batch, validation):
        images, backgrounds = batch[0], batch[1]
        bs = images.shape[0]
        preds = self.forward_test(images)
        # Pass native dtype into the kernel; the f32 cast happens in VMEM.
        psnr_sum, mse_sum = eval_metrics(backgrounds, preds, data_range=1.0)
        return dict(output=dict(num_samples=bs, psnr=psnr_sum, mse=mse_sum))


if __name__ == "__main__":
    key = jax.random.PRNGKey(0)
    k1, k2 = jax.random.split(key)
    B, C, H, W = 2, 4, 16, 16
    images = jax.random.uniform(k1, (B, C, H, W), dtype=jnp.float32)
    backgrounds = jax.random.uniform(k2, (B, C, H, W), dtype=jnp.float32)

    system = BaseSystemJAX()
    result = system.forward((images, backgrounds), batch_idx=0, mode="val")
    psnr = jax.block_until_ready(result["output"]["psnr"])
    mse = jax.block_until_ready(result["output"]["mse"])

    # Reference check (pure numpy), mirrors skimage PSNR with data_range=1.0.
    bg_np = np.asarray(backgrounds, dtype=np.float32)
    pr_np = np.asarray(images, dtype=np.float32)
    ref_psnr, ref_mse = 0.0, 0.0
    for i in range(B):
        m = ((bg_np[i] - pr_np[i]) ** 2).mean()
        ref_mse += m
        ref_psnr += 10.0 * np.log10(1.0 / m)
    np.testing.assert_allclose(float(psnr), ref_psnr, rtol=1e-4)
    np.testing.assert_allclose(float(mse), ref_mse, rtol=1e-4)

    print("KERNEL_OK")
</pallas_src>

<mosaic_0001>
module attributes {stable_mosaic.version = 11 : i64} {
  func.func @_sse_kernel(%arg0: i32, %arg1: i32, %arg2: memref<1x8x128xf32, #tpu.memory_space<vmem>>, %arg3: memref<1x8x128xf32, #tpu.memory_space<vmem>>, %arg4: memref<1x8x128xf32, #tpu.memory_space<vmem>>, %arg5: memref<1x128xf32, #tpu.memory_space<vmem>>) attributes {dimension_semantics = [#tpu.dimension_semantics<parallel>, #tpu.dimension_semantics<arbitrary>], iteration_bounds = array<i64: 2, 1>, scalar_prefetch = 0 : i64, scratch_operands = 1 : i64, tpu.core_type = #tpu.core_type<tc>, window_params = [{transform_indices = @transform_0, window_bounds = array<i64: 1, 8, 128>}, {transform_indices = @transform_1, window_bounds = array<i64: 1, 8, 128>}, {transform_indices = @transform_2, window_bounds = array<i64: 1, 8, 128>}]} {
    %c0_i32 = arith.constant 0 : i32
    %0 = arith.cmpi eq, %arg1, %c0_i32 : i32
    %1 = arith.extui %0 : i1 to i32
    %c0_i32_0 = arith.constant 0 : i32
    %2 = arith.cmpi ne, %1, %c0_i32_0 : i32
    scf.if %2 {
      %cst_12 = arith.constant 0.000000e+00 : f32
      %14 = vector.broadcast %cst_12 : f32 to vector<1x128xf32>
      %c0_13 = arith.constant 0 : index
      %c0_14 = arith.constant 0 : index
      %15 = vector.load %arg5[%c0_13, %c0_14] : memref<1x128xf32, #tpu.memory_space<vmem>>, vector<1x128xf32>
      tpu.vector_store %arg5[%c0_13, %c0_14], %14 {strides = array<i32>} : memref<1x128xf32, #tpu.memory_space<vmem>>, vector<1x128xf32>,
    } else {
    }
    %c0 = arith.constant 0 : index
    %c0_1 = arith.constant 0 : index
    %c0_2 = arith.constant 0 : index
    %3 = vector.load %arg2[%c0, %c0_1, %c0_2] : memref<1x8x128xf32, #tpu.memory_space<vmem>>, vector<1x8x128xf32>
    %c0_3 = arith.constant 0 : index
    %c0_4 = arith.constant 0 : index
    %c0_5 = arith.constant 0 : index
    %4 = vector.load %arg3[%c0_3, %c0_4, %c0_5] : memref<1x8x128xf32, #tpu.memory_space<vmem>>, vector<1x8x128xf32>
    %5 = arith.subf %3, %4 : vector<1x8x128xf32>
    %c0_6 = arith.constant 0 : index
    %c0_7 = arith.constant 0 : index
    %6 = vector.load %arg5[%c0_6, %c0_7] : memref<1x128xf32, #tpu.memory_space<vmem>>, vector<1x128xf32>
    %7 = arith.mulf %5, %5 : vector<1x8x128xf32>
    %cst = arith.constant dense<0.000000e+00> : vector<1x128xf32>
    %8 = vector.multi_reduction <add>, %7, %cst [1] : vector<1x8x128xf32> to vector<1x128xf32>
    %9 = arith.addf %6, %8 : vector<1x128xf32>
    %c0_8 = arith.constant 0 : index
    %c0_9 = arith.constant 0 : index
    %10 = vector.load %arg5[%c0_8, %c0_9] : memref<1x128xf32, #tpu.memory_space<vmem>>, vector<1x128xf32>
    tpu.vector_store %arg5[%c0_8, %c0_9], %9 {strides = array<i32>} : memref<1x128xf32, #tpu.memory_space<vmem>>, vector<1x128xf32>,
    %c0_i32_10 = arith.constant 0 : i32
    %11 = arith.cmpi eq, %arg1, %c0_i32_10 : i32
    %12 = arith.extui %11 : i1 to i32
    %c0_i32_11 = arith.constant 0 : i32
    %13 = arith.cmpi ne, %12, %c0_i32_11 : i32
    scf.if %13 {
      %c0_12 = arith.constant 0 : index
      %c0_13 = arith.constant 0 : index
      %14 = vector.load %arg5[%c0_12, %c0_13] : memref<1x128xf32, #tpu.memory_space<vmem>>, vector<1x128xf32>
      %15 = vector.shape_cast %14 : vector<1x128xf32> to vector<1x1x128xf32>
      %cst_14 = arith.constant dense<0.000000e+00> : vector<1xf32>
      %16 = vector.multi_reduction <add>, %15, %cst_14 [1, 2] : vector<1x1x128xf32> to vector<1xf32>
      %17 = vector.shape_cast %16 : vector<1xf32> to vector<1x1x1xf32>
      %18 = vector.extract %17[0, 0, 0] : f32 from vector<1x1x1xf32>
      %19 = vector.broadcast %18 : f32 to vector<1x8x128xf32>
      %c0_15 = arith.constant 0 : index
      %c0_16 = arith.constant 0 : index
      %c0_17 = arith.constant 0 : index
      %20 = vector.load %arg4[%c0_15, %c0_16, %c0_17] : memref<1x8x128xf32, #tpu.memory_space<vmem>>, vector<1x8x128xf32>
      tpu.vector_store %arg4[%c0_15, %c0_16, %c0_17], %19 {strides = array<i32>} : memref<1x8x128xf32, #tpu.memory_space<vmem>>, vector<1x8x128xf32>,
    } else {
    }
    return
  }
  func.func @transform_0(%arg0: i32, %arg1: i32) -> (i32, i32, i32) {
    %c0_i32 = arith.constant 0 : i32
    %c0_i32_0 = arith.constant 0 : i32
    return %arg0, %arg1, %c0_i32 : i32, i32, i32
  }
  func.func @transform_1(%arg0: i32, %arg1: i32) -> (i32, i32, i32) {
    %c0_i32 = arith.constant 0 : i32
    %c0_i32_0 = arith.constant 0 : i32
    return %arg0, %arg1, %c0_i32 : i32, i32, i32
  }
  func.func @transform_2(%arg0: i32, %arg1: i32) -> (i32, i32, i32) {
    %c0_i32 = arith.constant 0 : i32
    %c0_i32_0 = arith.constant 0 : i32
    %c0_i32_1 = arith.constant 0 : i32
    return %arg0, %c0_i32, %c0_i32_0 : i32, i32, i32
  }
}

</mosaic_0001>

<llo_original>
// kernel: tpu_custom_call.1
$region0: #{tpu_custom_call.1}
  #allocation0 [shape = 'u32[]', space=smem, size = 0x4, offset = 0x4, fixed_abs, tag = 'smem constant byte address 0x4 - core index']
  #allocation1 [shape = 'u32[144,128]{1,0:T(1,128)}', space=vmem, size = 0x12000, scoped, tag = 'internal scratch']
  #allocation2 [shape = 'f32[1,128]{1,0:T(1,128)}', space=vmem, size = 0x200, scoped, tag = 'scratch operand']
  %s0 = inlined_call_operand.hbm [shape: f32[2,8,128], index: 0, kind: input, shape index: {}]
  %s1 = inlined_call_operand.hbm [shape: f32[2,8,128], index: 1, kind: input, shape index: {}]
  %s2 = inlined_call_operand.hbm [shape: f32[2,8,128], index: 2, kind: output, shape index: {}]
  %s3 = sld [smem:[#allocation0]]
  $region57: #{tpu_custom_call.1} parent=0
    _
  %s5 = ssub.s32 1, %s3
  %s6 = scalar_select 0, %s5, %s3
  $region1: #{tpu_custom_call.1} parent=0
    #allocation3 [shape = 'u8[8192]{0}', space=vmem, size = 0x2000, scoped, tag = 'input window, operand 0']
    #allocation4 [shape = 's32[2]{0}', space=sflag, size = 0x8, scoped, tag = 'scoped memory for tpu_custom_call.1']
    #allocation5 [shape = 's32[2]{0}', space=sflag, size = 0x8, scoped, tag = 'scoped memory for tpu_custom_call.1']
    #allocation6 [shape = 'u8[8192]{0}', space=vmem, size = 0x2000, scoped, tag = 'input window, operand 1']
    #allocation7 [shape = 's32[2]{0}', space=sflag, size = 0x8, scoped, tag = 'scoped memory for tpu_custom_call.1']
    #allocation8 [shape = 'u8[8192]{0}', space=vmem, size = 0x2000, scoped, tag = 'output window, operand 0']
    %7 = vsyncpa [#allocation4], 0
    %s8 = scalar_lea.sflag [#allocation4], 1
    %9 = vsyncpa %s8, 0
    %10 = vsyncpa [#allocation7], 0
    %s11 = scalar_lea.sflag [#allocation7], 1
    %12 = vsyncpa %s11, 0
    %13 = vsyncpa [#allocation5], 0
    %s14 = scalar_lea.sflag [#allocation5], 1
    %15 = vsyncpa %s14, 0
    loop: start=0, step=1, limit=4
    $region2: #{tpu_custom_call.1} parent=1 // loop_pre_header
      _
    $region3: #{tpu_custom_call.1} parent=1 // loop_header
      %s17 = sphi 0, %s21
      %p18 = scmp.ge.s32.totalorder %s17, 4
      %s24 = sphi 0, %s36
      %s25 = sphi 0, %s32
      %s26 = sphi 0, %s24
      %s27 = sphi 0, %s25
      %s28 = sphi 0, %s26
      %s29 = sphi 0, %s27
      %s41 = sphi 0, %s43
      %s44 = sphi 0, %s41
      %s45 = sphi 0, %s44
      %s61 = sphi 0, %s45
      %s69 = sphi 0, %s71
      %s72 = sphi 0, %s69
      %s73 = sphi 0, %s72
      %s89 = sphi 0, %s73
      %s95 = sphi 0, %s97
      %s98 = sphi 0, %s95
      %s99 = sphi 0, %s98
      %s115 = sphi 0, %s99
    $region4: #{tpu_custom_call.1} parent=1 // loop_header_branch
      %20 = sbr.rel (%p18) target = $region8
    $region5: #{tpu_custom_call.1} parent=1 // loop_body
      %s22 = ssub.s32 %s17, 1
      %s23 = ssub.s32 %s17, 2
      %s30 = sadd.s32 1, %s25
      %p31 = scmp.ge.s32.totalorder %s30, 1
      %s32 = scalar_select %p31, 0, %s30
      %s33 = sadd.s32 1, %s24
      %s34 = scalar_select %p31, %s33, %s24
      %p35 = scmp.ge.s32.totalorder %s34, 2
      %s36 = scalar_select %p35, 0, %s34
      %s37 = ssub.s32 %s24, %s36
      %s38 = ssub.s32 %s25, %s32
      %s39 = sor.u32 %s37, %s38
      %p40 = scmp.eq.s32.totalorder %s39, 0
      %s42 = sadd.s32 %s41, 1
      %s43 = scalar_select %p40, %s41, %s42
      %p46 = pneg %p40
      %p47 = scmp.eq.s32.totalorder %s17, 1
      %p48 = por %p46, %p47
      %p49 = scmp.ne.s32.totalorder %s41, %s44
      %p50 = scmp.eq.s32.totalorder %s17, 0
      %p51 = por %p49, %p50
      %p52 = scmp.ne.s32.totalorder %s41, %s44
      %p53 = scmp.eq.s32.totalorder %s22, 1
      %p54 = por %p52, %p53
      %p55 = scmp.ne.s32.totalorder %s44, %s45
      %p56 = scmp.eq.s32.totalorder %s22, 0
      %p57 = por %p55, %p56
      %p58 = scmp.ne.s32.totalorder %s44, %s45
      %p59 = scmp.eq.s32.totalorder %s23, 1
      %p60 = por %p58, %p59
      %p62 = scmp.ne.s32.totalorder %s45, %s61
      %p63 = scmp.eq.s32.totalorder %s23, 0
      %p64 = por %p62, %p63
      %s65 = ssub.s32 %s24, %s36
      %s66 = ssub.s32 %s25, %s32
      %s67 = sor.u32 %s65, %s66
      %p68 = scmp.eq.s32.totalorder %s67, 0
      %s70 = sadd.s32 %s69, 1
      %s71 = scalar_select %p68, %s69, %s70
      %p74 = pneg %p68
      %p75 = scmp.eq.s32.totalorder %s17, 1
      %p76 = por %p74, %p75
      %p77 = scmp.ne.s32.totalorder %s69, %s72
      %p78 = scmp.eq.s32.totalorder %s17, 0
      %p79 = por %p77, %p78
      %p80 = scmp.ne.s32.totalorder %s69, %s72
      %p81 = scmp.eq.s32.totalorder %s22, 1
      %p82 = por %p80, %p81
      %p83 = scmp.ne.s32.totalorder %s72, %s73
      %p84 = scmp.eq.s32.totalorder %s22, 0
      %p85 = por %p83, %p84
      %p86 = scmp.ne.s32.totalorder %s72, %s73
      %p87 = scmp.eq.s32.totalorder %s23, 1
      %p88 = por %p86, %p87
      %p90 = scmp.ne.s32.totalorder %s73, %s89
      %p91 = scmp.eq.s32.totalorder %s23, 0
      %p92 = por %p90, %p91
      %s93 = ssub.s32 %s24, %s36
      %p94 = scmp.eq.s32.totalorder %s93, 0
      %s96 = sadd.s32 %s95, 1
      %s97 = scalar_select %p94, %s95, %s96
      %p100 = pneg %p94
      %p101 = scmp.eq.s32.totalorder %s17, 1
      %p102 = por %p100, %p101
      %p103 = scmp.ne.s32.totalorder %s95, %s98
      %p104 = scmp.eq.s32.totalorder %s17, 0
      %p105 = por %p103, %p104
      %p106 = scmp.ne.s32.totalorder %s95, %s98
      %p107 = scmp.eq.s32.totalorder %s22, 1
      %p108 = por %p106, %p107
      %p109 = scmp.ne.s32.totalorder %s98, %s99
      %p110 = scmp.eq.s32.totalorder %s22, 0
      %p111 = por %p109, %p110
      %p112 = scmp.ne.s32.totalorder %s98, %s99
      %p113 = scmp.eq.s32.totalorder %s23, 1
      %p114 = por %p112, %p113
      %p116 = scmp.ne.s32.totalorder %s99, %s115
      %p117 = scmp.eq.s32.totalorder %s23, 0
      %p118 = por %p116, %p117
      %p119 = scmp.le.s32.totalorder 1, %s17
      %p120 = scmp.lt.s32.totalorder %s17, 3
      %p121 = pnand %p119, %p120
      %p122 = pneg %p121
      // Predicated region
      $region9: #{tpu_custom_call.1} parent=5 // pred_check
        _
      $region10: #{tpu_custom_call.1} parent=5 // pred_check_branch
        %124 = sbr.rel (%p121) target = $region12
      $region11: #{tpu_custom_call.1} parent=5 // pred_region
        %s125 = ssub.s32 %s17, 1
      $region12: #{tpu_custom_call.1} parent=5 // pred_fallthru
        _
      %p126 = scmp.lt.s32.totalorder %s17, 2
      // Predicated region
      $region13: #{tpu_custom_call.1} parent=5 // pred_check
        %p127 = pneg %p126
      $region14: #{tpu_custom_call.1} parent=5 // pred_check_branch
        %129 = sbr.rel (%p127) target = $region16
      $region15: #{tpu_custom_call.1} parent=5 // pred_region
        // Predicated region
        $region17: #{tpu_custom_call.1} parent=15 // pred_check
          %p130 = pneg %p51
        $region18: #{tpu_custom_call.1} parent=15 // pred_check_branch
          %132 = sbr.rel (%p130) target = $region20
        $region19: #{tpu_custom_call.1} parent=15 // pred_region
          %s133 = sand.u32 %s41, 1
          %s134 = scalar_lea.sflag [#allocation4], %s133
          %s135 = sand.u32 %s41, 1
          %s136 = smul.addr %s135, 8
          %s137 = scalar_lea.vmem [#allocation3], %s136
          %s139 = ssub.s32 128, 128
          %140 = vsyncadd %s134, %s139
          %s141 = sadd.s32 %s25, %s24
          %s142 = smul.addr %s141, 128
          %s143 = scalar_lea.hbm %s0, %s142
          %s145 = sshll.u32 %s137, 4
          %s146 = int_to_ptr.vmem [resolvable:$true] %s145
          %148 = dma.hbm_to_vmem [thread:$0]  %s143, 128, %s146, %s134
        $region20: #{tpu_custom_call.1} parent=15 // pred_fallthru
          _
        // Predicated region
        $region21: #{tpu_custom_call.1} parent=15 // pred_check
          %p149 = pneg %p79
        $region22: #{tpu_custom_call.1} parent=15 // pred_check_branch
          %151 = sbr.rel (%p149) target = $region24
        $region23: #{tpu_custom_call.1} parent=15 // pred_region
          %s152 = sand.u32 %s69, 1
          %s153 = scalar_lea.sflag [#allocation7], %s152
          %s154 = sand.u32 %s69, 1
          %s155 = smul.addr %s154, 8
          %s156 = scalar_lea.vmem [#allocation6], %s155
          %s158 = ssub.s32 128, 128
          %159 = vsyncadd %s153, %s158
          %s160 = sadd.s32 %s25, %s24
          %s161 = smul.addr %s160, 128
          %s162 = scalar_lea.hbm %s1, %s161
          %s164 = sshll.u32 %s156, 4
          %s165 = int_to_ptr.vmem [resolvable:$true] %s164
          %167 = dma.hbm_to_vmem [thread:$0]  %s162, 128, %s165, %s153
        $region24: #{tpu_custom_call.1} parent=15 // pred_fallthru
          _
      $region16: #{tpu_custom_call.1} parent=5 // pred_fallthru
        _
      %p168 = scmp.le.s32.totalorder 1, %s17
      %p169 = scmp.lt.s32.totalorder %s17, 3
      %p170 = pnand %p168, %p169
      %p171 = pneg %p170
      // Predicated region
      $region25: #{tpu_custom_call.1} parent=5 // pred_check
        _
      $region26: #{tpu_custom_call.1} parent=5 // pred_check_branch
        %173 = sbr.rel (%p170) target = $region28
      $region27: #{tpu_custom_call.1} parent=5 // pred_region
        %s174 = ssub.s32 %s17, 1
        %s175 = sand.u32 %s44, 1
        %s176 = scalar_lea.sflag [#allocation4], %s175
        %s177 = sand.u32 %s44, 1
        %s178 = smul.addr %s177, 8
        %s179 = scalar_lea.vmem [#allocation3], %s178
        // Predicated region
        $region29: #{tpu_custom_call.1} parent=27 // pred_check
          %p180 = pneg %p57
        $region30: #{tpu_custom_call.1} parent=27 // pred_check_branch
          %182 = sbr.rel (%p180) target = $region32
        $region31: #{tpu_custom_call.1} parent=27 // pred_region
          %183 = dma.done %s176, 128
        $region32: #{tpu_custom_call.1} parent=27 // pred_fallthru
          _
        %s184 = sand.u32 %s72, 1
        %s185 = scalar_lea.sflag [#allocation7], %s184
        %s186 = sand.u32 %s72, 1
        %s187 = smul.addr %s186, 8
        %s188 = scalar_lea.vmem [#allocation6], %s187
        // Predicated region
        $region33: #{tpu_custom_call.1} parent=27 // pred_check
          %p189 = pneg %p85
        $region34: #{tpu_custom_call.1} parent=27 // pred_check_branch
          %191 = sbr.rel (%p189) target = $region36
        $region35: #{tpu_custom_call.1} parent=27 // pred_region
          %192 = dma.done %s185, 128
        $region36: #{tpu_custom_call.1} parent=27 // pred_fallthru
          _
        %s193 = sand.u32 %s44, 1
        %s194 = scalar_lea.sflag [#allocation4], %s193
        %s195 = sand.u32 %s44, 1
        %s196 = smul.addr %s195, 8
        %s197 = scalar_lea.vmem [#allocation3], %s196
        %p198 = pneg %p57
        %p199 = pneg %p54
        %s200 = sand.u32 %s72, 1
        %s201 = scalar_lea.sflag [#allocation7], %s200
        %s202 = sand.u32 %s72, 1
        %s203 = smul.addr %s202, 8
        %s204 = scalar_lea.vmem [#allocation6], %s203
        %p205 = pneg %p85
        %p206 = pneg %p82
        %p207 = pneg %p111
        %p208 = pneg %p108
        %s209 = sand.u32 %s98, 1
        %s210 = scalar_lea.sflag [#allocation5], %s209
        %s211 = sand.u32 %s98, 1
        %s212 = smul.addr %s211, 8
        %s213 = scalar_lea.vmem [#allocation8], %s212
        %p214 = scmp.eq.s32.totalorder %s27, 0
        // Predicated region
        $region37: #{tpu_custom_call.1} parent=27 // pred_check
          %p215 = pneg %p214
        $region38: #{tpu_custom_call.1} parent=27 // pred_check_branch
          %217 = sbr.rel (%p215) target = $region40
        $region39: #{tpu_custom_call.1} parent=27 // pred_region
          %218 = vst [vmem:[#allocation2] sm:$0x1] 0.0
        $region40: #{tpu_custom_call.1} parent=27 // pred_fallthru
          _
        %v219 = vld [vmem:[%s179] sm:$0xff]
        %v220 = vld [vmem:[%s188] sm:$0xff]
        %v221 = vsub.f32 %v219, %v220
        %v222 = vld [vmem:[#allocation2] sm:$0x1]
        %v223 = vmul.f32 %v221, %v221
        %v224 = vrot.slane %v223, 4
        %v225 = vadd.f32 %v223, %v224
        %v226 = vrot.slane %v225, 2
        %v227 = vadd.f32 %v225, %v226
        %v228 = vrot.slane %v227, 1
        %v229 = vadd.f32 %v227, %v228
        %v230 = vadd.f32 %v222, %v229
        %231 = vst [vmem:[#allocation2] sm:$0x1] %v230
        // Predicated region
        $region41: #{tpu_custom_call.1} parent=27 // pred_check
          %p232 = pneg %p214
        $region42: #{tpu_custom_call.1} parent=27 // pred_check_branch
          %234 = sbr.rel (%p232) target = $region44
        $region43: #{tpu_custom_call.1} parent=27 // pred_region
          %v235 = vld [vmem:[#allocation2] sm:$0x1]
          %vm236 = vcmask 1040384
          %v237 = vsel %vm236, %v235, 0.0
          %238 = vadd.xlane.f32.xlu0 %v237
          %v239 = vpop.xlane.xlu0 %238
          %v240 = vrot.slane %v239, 4
          %v241 = vadd.f32 %v239, %v240
          %v242 = vrot.slane %v241, 2
          %v243 = vadd.f32 %v241, %v242
          %v244 = vrot.slane %v243, 1
          %v245 = vadd.f32 %v243, %v244
          %s246 = vtos %v245
          %v247 = vstv %s246
          %248 = vst [vmem:[%s213] sm:$0xff] %v247
        $region44: #{tpu_custom_call.1} parent=27 // pred_fallthru
          _
        %s249 = sand.u32 %s98, 1
        %s250 = scalar_lea.sflag [#allocation5], %s249
        %s251 = sand.u32 %s98, 1
        %s252 = smul.addr %s251, 8
        %s253 = scalar_lea.vmem [#allocation8], %s252
        // Predicated region
        $region45: #{tpu_custom_call.1} parent=27 // pred_check
          %p254 = pneg %p108
        $region46: #{tpu_custom_call.1} parent=27 // pred_check_branch
          %256 = sbr.rel (%p254) target = $region48
        $region47: #{tpu_custom_call.1} parent=27 // pred_region
          %s258 = ssub.s32 128, 128
          %259 = vsyncadd %s250, %s258
          %s260 = smul.addr %s26, 128
          %s261 = scalar_lea.hbm %s2, %s260
          %s263 = sshll.u32 %s253, 4
          %s264 = int_to_ptr.vmem [resolvable:$true] %s263
          %266 = dma.vmem_to_hbm [thread:$0]  %s264, 128, %s261, %s250
        $region48: #{tpu_custom_call.1} parent=27 // pred_fallthru
          _
      $region28: #{tpu_custom_call.1} parent=5 // pred_fallthru
        _
      %p267 = scmp.le.s32.totalorder 2, %s17
      // Predicated region
      $region49: #{tpu_custom_call.1} parent=5 // pred_check
        %p268 = pneg %p267
      $region50: #{tpu_custom_call.1} parent=5 // pred_check_branch
        %270 = sbr.rel (%p268) target = $region52
      $region51: #{tpu_custom_call.1} parent=5 // pred_region
        %s271 = ssub.s32 %s17, 2
        // Predicated region
        $region53: #{tpu_custom_call.1} parent=51 // pred_check
          %p272 = pneg %p114
        $region54: #{tpu_custom_call.1} parent=51 // pred_check_branch
          %274 = sbr.rel (%p272) target = $region56
        $region55: #{tpu_custom_call.1} parent=51 // pred_region
          %s275 = sand.u32 %s99, 1
          %s276 = scalar_lea.sflag [#allocation5], %s275
          %s277 = sand.u32 %s99, 1
          %s278 = smul.addr %s277, 8
          %s279 = scalar_lea.vmem [#allocation8], %s278
          %280 = dma.done %s276, 128
        $region56: #{tpu_custom_call.1} parent=51 // pred_fallthru
          _
      $region52: #{tpu_custom_call.1} parent=5 // pred_fallthru
        _
    $region6: #{tpu_custom_call.1} parent=1 // loop_footer
      %s21 = sadd.s32 1, %s17
    $region7: #{tpu_custom_call.1} parent=1 // loop_footer_branch
      %16 = sbr.rel target = $region3
    $region8: #{tpu_custom_call.1} parent=1 // loop_exit
      _
    %281 = vsyncpa [#allocation4], 1
    %s282 = scalar_lea.sflag [#allocation4], 1
    %283 = vsyncpa %s282, 1
    %284 = vsyncpa [#allocation7], 1
    %s285 = scalar_lea.sflag [#allocation7], 1
    %286 = vsyncpa %s285, 1
    %287 = vsyncpa [#allocation5], 1
    %s288 = scalar_lea.sflag [#allocation5], 1
    %289 = vsyncpa %s288, 1

</llo_original>
